<compile_context>
chip_gen: v5e
topology: v5e:2x2
jax: 0.10.0
libtpu: 0.0.40
codegen_flags: <defaults>
</compile_context>

<pallas_src>
import functools

import jax
import jax.numpy as jnp
from jax.experimental import pallas as pl
from jax.experimental.pallas import tpu as pltpu


# ---------------------------------------------------------------------------
# helpers
# ---------------------------------------------------------------------------
def _round_up(x, m):
    return (x + m - 1) // m * m


def _pick_tile(n, candidates, min_steps=1):
    for c in candidates:
        if n % c == 0 and n // c >= min_steps:
            return c
    for c in candidates:
        if n % c == 0:
            return c
    return n


def _pad2(x, rows, cols):
    return jnp.pad(x, ((0, rows - x.shape[0]), (0, cols - x.shape[1])))


# ---------------------------------------------------------------------------
# kernel 1: one GraphConv(aggr='mean') layer + ReLU, tiled over A
# ---------------------------------------------------------------------------
def _gconv_kernel(a_ref, xsrc_ref, xdst_ref, wrel_ref, wroot_ref, b_ref,
                  out_ref, agg_ref):
    k = pl.program_id(1)

    @pl.when(k == 0)
    def _():
        agg_ref[...] = jnp.zeros_like(agg_ref)

    # bf16 A tile x bf16 xsrc tile -> f32 accumulation.  xsrc column d-1 is a
    # constant 1.0 (zero-weight padding column), so agg[:, d-1] accumulates the
    # in-degree on the MXU — no VPU cast / XLU row-sum in the hot loop.
    agg_ref[...] += jnp.dot(a_ref[...], xsrc_ref[...],
                            preferred_element_type=jnp.float32)

    @pl.when(k == pl.num_programs(1) - 1)
    def _():
        d = agg_ref.shape[1]
        agg = agg_ref[...]
        deg = agg[:, d - 1:d]                                 # MXU-computed in-degree
        # scatter-mean: empty neighborhood -> agg row already 0, clamp is safe
        inv_deg = pl.reciprocal(jnp.maximum(deg, 1.0), approx=True)
        mean = agg * inv_deg                                  # (tm, d) mean aggregation
        h = (jnp.dot(mean, wrel_ref[...], preferred_element_type=jnp.float32)
             + jnp.dot(xdst_ref[...].astype(jnp.float32), wroot_ref[...],
                       preferred_element_type=jnp.float32)
             + b_ref[...])
        h = jnp.maximum(h, 0.0)                               # xReLU('ReLU')
        # Re-plant the 1.0 degree column so the next layer / head kernel can
        # reuse the same MXU trick (one lane-dense store, no narrow writes).
        col = jax.lax.broadcasted_iota(jnp.int32, h.shape, 1)
        out_ref[...] = jnp.where(col == d - 1, 1.0, h).astype(out_ref.dtype)


def _graphconv_relu(a_bf16, x_bf16, wrel, wroot, bias, *, tm, tk):
    npad = a_bf16.shape[0]
    d = x_bf16.shape[1]
    grid = (npad // tm, npad // tk)
    flops = int(2 * npad * npad * d + 4 * npad * d * d)
    bytes_acc = int(2 * a_bf16.size                          # A streamed once (bf16)
                    + (npad // tm) * 2 * x_bf16.size         # xsrc re-streamed per row tile
                    + 2 * x_bf16.size                        # xdst once (bf16)
                    + 4 * (wrel.size + wroot.size + bias.size)
                    + 2 * npad * d)                          # bf16 output
    return pl.pallas_call(
        _gconv_kernel,
        out_shape=jax.ShapeDtypeStruct((npad, d), jnp.bfloat16),
        grid_spec=pltpu.PrefetchScalarGridSpec(
            num_scalar_prefetch=0,
            grid=grid,
            in_specs=[
                pl.BlockSpec((tm, tk), lambda i, k: (i, k)),   # A[dst, src] tile (bf16)
                pl.BlockSpec((tk, d), lambda i, k: (k, 0)),    # source features (bf16)
                pl.BlockSpec((tm, d), lambda i, k: (i, 0)),    # dst features (root term, bf16)
                pl.BlockSpec((d, d), lambda i, k: (0, 0)),     # w_rel (resident, f32)
                pl.BlockSpec((d, d), lambda i, k: (0, 0)),     # w_root (resident, f32)
                pl.BlockSpec((1, d), lambda i, k: (0, 0)),     # bias (resident, f32)
            ],
            out_specs=pl.BlockSpec((tm, d), lambda i, k: (i, 0)),
            scratch_shapes=[
                pltpu.VMEM((tm, d), jnp.float32),              # aggregation accumulator
            ],
        ),
        compiler_params=pltpu.CompilerParams(
            dimension_semantics=("parallel", "arbitrary"),
            vmem_limit_bytes=48 * 1024 * 1024,                 # <= 64 MiB (v7x physical)
        ),
        cost_estimate=pl.CostEstimate(flops=flops, transcendentals=npad,
                                      bytes_accessed=bytes_acc),
    )(a_bf16, x_bf16, x_bf16, wrel, wroot, bias)


# ---------------------------------------------------------------------------
# kernel 2: global_mean_pool(x1), global_mean_pool(x2), JK('cat'),
#           lin1 + ReLU, dropout(eval)=identity, lin2, log_softmax
# ---------------------------------------------------------------------------
def _head_kernel(num_classes, b_ref, h1_ref, h2_ref, w1a_ref, w1b_ref, b1_ref,
                 w2_ref, b2_ref, out_ref, s1_ref, s2_ref):
    j = pl.program_id(0)

    @pl.when(j == 0)
    def _():
        s1_ref[...] = jnp.zeros_like(s1_ref)
        s2_ref[...] = jnp.zeros_like(s2_ref)

    bm = b_ref[...]                                           # (G, tn) one-hot, bf16
    s1_ref[...] += jnp.dot(bm, h1_ref[...], preferred_element_type=jnp.float32)
    s2_ref[...] += jnp.dot(bm, h2_ref[...], preferred_element_type=jnp.float32)

    @pl.when(j == pl.num_programs(0) - 1)
    def _():
        d = s1_ref.shape[1]
        s1 = s1_ref[...]
        s2 = s2_ref[...]
        # h1[:, d-1] == 1.0 for every real node, so the degree column of the
        # pooled sum is exactly the per-graph node count (computed on the MXU).
        cnt = s1[:, d - 1:d]
        inv_cnt = pl.reciprocal(jnp.maximum(cnt, 1.0), approx=True)
        p1 = s1 * inv_cnt                                     # global_mean_pool layer 1
        p2 = s2 * inv_cnt                                     # global_mean_pool layer 2
        # JumpingKnowledge('cat') + lin1 as two dots (no (G, 2d) concat temp)
        z = (jnp.dot(p1, w1a_ref[...], preferred_element_type=jnp.float32)
             + jnp.dot(p2, w1b_ref[...], preferred_element_type=jnp.float32)
             + b1_ref[...])
        z = jnp.maximum(z, 0.0)
        # F.dropout(p=0.5) in eval mode -> identity
        logits = jnp.dot(z, w2_ref[...], preferred_element_type=jnp.float32) + b2_ref[...]
        # mask lane-padded class columns, then numerically stable log_softmax
        col = jax.lax.broadcasted_iota(jnp.int32, logits.shape, 1)
        logits = jnp.where(col < num_classes, logits, -1e30)
        m = jnp.max(logits, axis=-1, keepdims=True)
        lse = jnp.log(jnp.sum(jnp.exp(logits - m), axis=-1, keepdims=True)) + m
        out_ref[...] = logits - lse


def _pool_jk_mlp(b_bf16, h1, h2, w1a, w1b, b1, w2, b2, *, num_classes, tn):
    g, npad = b_bf16.shape
    d = h1.shape[1]
    cpad = w2.shape[1]
    grid = (npad // tn,)
    flops = int(4 * g * npad * d + 4 * g * d * d + 2 * g * d * cpad)
    bytes_acc = int(2 * b_bf16.size + 2 * h1.size + 2 * h2.size
                    + 4 * (w1a.size + w1b.size + b1.size + w2.size + b2.size)
                    + 4 * g * cpad)
    return pl.pallas_call(
        functools.partial(_head_kernel, num_classes),
        out_shape=jax.ShapeDtypeStruct((g, cpad), jnp.float32),
        grid_spec=pltpu.PrefetchScalarGridSpec(
            num_scalar_prefetch=0,
            grid=grid,
            in_specs=[
                pl.BlockSpec((g, tn), lambda j: (0, j)),       # one-hot membership tile (bf16)
                pl.BlockSpec((tn, d), lambda j: (j, 0)),       # h1 node tile (bf16)
                pl.BlockSpec((tn, d), lambda j: (j, 0)),       # h2 node tile (bf16)
                pl.BlockSpec((d, d), lambda j: (0, 0)),        # lin1 weight, pool-1 half
                pl.BlockSpec((d, d), lambda j: (0, 0)),        # lin1 weight, pool-2 half
                pl.BlockSpec((1, d), lambda j: (0, 0)),        # lin1 bias
                pl.BlockSpec((d, cpad), lambda j: (0, 0)),     # lin2 weight
                pl.BlockSpec((1, cpad), lambda j: (0, 0)),     # lin2 bias
            ],
            out_specs=pl.BlockSpec((g, cpad), lambda j: (0, 0)),
            scratch_shapes=[
                pltpu.VMEM((g, d), jnp.float32),               # sum pool layer 1
                pltpu.VMEM((g, d), jnp.float32),               # sum pool layer 2
            ],
        ),
        compiler_params=pltpu.CompilerParams(
            dimension_semantics=("arbitrary",),
            vmem_limit_bytes=32 * 1024 * 1024,
        ),
        cost_estimate=pl.CostEstimate(flops=flops, transcendentals=g * cpad,
                                      bytes_accessed=bytes_acc),
    )(b_bf16, h1, h2, w1a, w1b, b1, w2, b2)


# ---------------------------------------------------------------------------
# full forward
# ---------------------------------------------------------------------------
def asap_forward(A, X, B, params):
    """ASAP (num_layers=2) forward; returns [G, C] log-probabilities."""
    n, f = X.shape
    g = B.shape[0]
    h = params["w_rel1"].shape[1]
    c = params["w_lin2"].shape[1]

    # lane-dense padded sizes; +1 reserves an always-zero-weight column used to
    # carry a constant 1.0 so degree / node counts come out of the MXU for free
    d = _round_up(max(f, h) + 1, 128)
    cpad = _round_up(c, 128)
    npad = _round_up(n, 128)

    tm = _pick_tile(npad, (1024, 512, 256, 128), min_steps=2)   # dst-row tile of A
    tk = _pick_tile(npad, (2048, 1024, 512, 256, 128))          # src-col (reduction) tile
    tn = _pick_tile(npad, (2048, 1024, 512, 256, 128))          # node tile for the head pass

    # pad + cast graph structure (edge counts / 0-1 are exact in bf16)
    a_bf16 = _pad2(A, npad, npad).astype(jnp.bfloat16)
    b_bf16 = _pad2(B, g, npad).astype(jnp.bfloat16)
    # padded node features in bf16 with the constant-1 degree column planted
    xp = _pad2(X, npad, d).at[:, d - 1].set(1.0).astype(jnp.bfloat16)

    # GraphConv weights padded to (d, d); row/column d-1 stays zero by padding
    wrel1 = _pad2(params["w_rel1"], d, d)
    wroot1 = _pad2(params["w_root1"], d, d)
    bias1 = _pad2(params["b_rel1"], 1, d)
    wrel2 = _pad2(params["w_rel2"], d, d)
    wroot2 = _pad2(params["w_root2"], d, d)
    bias2 = _pad2(params["b_rel2"], 1, d)

    # MLP head weights remapped to the padded JumpingKnowledge('cat') layout,
    # split into the two pooled halves (avoids an in-kernel concat)
    w_lin1 = params["w_lin1"]
    w1a = jnp.zeros((d, d), jnp.float32).at[:h, :h].set(w_lin1[:h])
    w1b = jnp.zeros((d, d), jnp.float32).at[:h, :h].set(w_lin1[h:])
    bl1 = _pad2(params["b_lin1"], 1, d)
    w2 = _pad2(params["w_lin2"], d, cpad)
    bl2 = _pad2(params["b_lin2"], 1, cpad)

    # layer 1 (F->H) and layer 2 (H->H), each streaming A once; bf16 outputs
    h1 = _graphconv_relu(a_bf16, xp, wrel1, wroot1, bias1, tm=tm, tk=tk)
    h2 = _graphconv_relu(a_bf16, h1, wrel2, wroot2, bias2, tm=tm, tk=tk)

    out_pad = _pool_jk_mlp(b_bf16, h1, h2, w1a, w1b, bl1, w2, bl2,
                           num_classes=c, tn=tn)
    return out_pad[:, :c]


# ---------------------------------------------------------------------------
# pure-JAX reference (for a sanity check only)
# ---------------------------------------------------------------------------
def asap_reference(A, X, B, params):
    deg = jnp.sum(A, axis=-1, keepdims=True)
    inv_deg = jnp.where(deg > 0.0, 1.0 / jnp.where(deg > 0.0, deg, 1.0), 0.0)
    cnt = jnp.sum(B, axis=-1, keepdims=True)
    inv_cnt = jnp.where(cnt > 0.0, 1.0 / jnp.where(cnt > 0.0, cnt, 1.0), 0.0)
    h1 = jnp.maximum(((A @ X) * inv_deg) @ params["w_rel1"]
                     + X @ params["w_root1"] + params["b_rel1"], 0.0)
    p1 = (B @ h1) * inv_cnt
    h2 = jnp.maximum(((A @ h1) * inv_deg) @ params["w_rel2"]
                     + h1 @ params["w_root2"] + params["b_rel2"], 0.0)
    p2 = (B @ h2) * inv_cnt
    xs = jnp.concatenate([p1, p2], axis=-1)
    z = jnp.maximum(xs @ params["w_lin1"] + params["b_lin1"], 0.0)
    logits = z @ params["w_lin2"] + params["b_lin2"]
    return jax.nn.log_softmax(logits, axis=-1)


# ---------------------------------------------------------------------------
# deterministic synthetic graph / parameters
# ---------------------------------------------------------------------------
def make_params(key, num_features, hidden, num_classes, num_layers=2):
    """Deterministic synthetic parameters (torch Linear weights stored as [in, out])."""
    ks = jax.random.split(key, 16)
    s = 0.1
    return {
        # conv1 = GraphConv(num_features, hidden, aggr='mean')
        "w_rel1":  s * jax.random.normal(ks[0], (num_features, hidden), jnp.float32),
        "b_rel1":  s * jax.random.normal(ks[1], (1, hidden), jnp.float32),
        "w_root1": s * jax.random.normal(ks[2], (num_features, hidden), jnp.float32),
        # convs[0] = GraphConv(hidden, hidden, aggr='mean')
        "w_rel2":  s * jax.random.normal(ks[3], (hidden, hidden), jnp.float32),
        "b_rel2":  s * jax.random.normal(ks[4], (1, hidden), jnp.float32),
        "w_root2": s * jax.random.normal(ks[5], (hidden, hidden), jnp.float32),
        # lin1 = Linear(num_layers * hidden, hidden)
        "w_lin1":  s * jax.random.normal(ks[6], (num_layers * hidden, hidden), jnp.float32),
        "b_lin1":  s * jax.random.normal(ks[7], (1, hidden), jnp.float32),
        # lin2 = Linear(hidden, num_classes)
        "w_lin2":  s * jax.random.normal(ks[8], (hidden, num_classes), jnp.float32),
        "b_lin2":  s * jax.random.normal(ks[9], (1, num_classes), jnp.float32),
    }


def build_graph(num_nodes, num_graphs):
    """Deterministic batched graph: bidirectional ring per graph plus two chords."""
    per = num_nodes // num_graphs
    src_list, dst_list, batch = [], [], []
    for g in range(num_graphs):
        base = g * per
        for i in range(per):
            batch.append(g)
            a, b = base + i, base + (i + 1) % per
            src_list += [a, b]
            dst_list += [b, a]
        src_list += [base, base + per // 2]
        dst_list += [base + per // 2, base]
    edge_index = jnp.array([src_list, dst_list], dtype=jnp.int32)  # [2, E]
    batch = jnp.array(batch, dtype=jnp.int32)                      # [N]
    return edge_index, batch


def densify(edge_index, batch, num_nodes, num_graphs):
    """edge_index -> dense multiplicity matrix A[dst, src]; batch -> one-hot B."""
    src, dst = edge_index[0], edge_index[1]
    A = jnp.zeros((num_nodes, num_nodes), jnp.float32).at[dst, src].add(1.0)
    B = jnp.zeros((num_graphs, num_nodes), jnp.float32).at[
        batch, jnp.arange(num_nodes)].set(1.0)
    return A, B


def _run_case(key, n_nodes, num_features, hidden, num_classes, num_graphs):
    k_x, k_p = jax.random.split(key)
    x = jax.random.normal(k_x, (n_nodes, num_features), jnp.float32)
    edge_index, batch = build_graph(n_nodes, num_graphs)
    A, B = densify(edge_index, batch, n_nodes, num_graphs)
    params = make_params(k_p, num_features, hidden, num_classes)

    out = asap_forward(A, x, B, params)        # [num_graphs, num_classes] log-probs
    out = jax.block_until_ready(out)

    assert out.shape == (num_graphs, num_classes)
    assert bool(jnp.all(jnp.isfinite(out)))
    # rows of log_softmax must exp-sum to 1
    assert bool(jnp.allclose(jnp.exp(out).sum(-1), 1.0, atol=1e-5))
    # loose check vs pure-JAX reference (bf16 activations + approx reciprocals)
    ref = asap_reference(A, x, B, params)
    assert bool(jnp.allclose(out, ref, atol=0.1)), (out, ref)
    return out


if __name__ == "__main__":
    # Small shapes consistent with the module:
    NUM_FEATURES = 8    # dataset.num_features
    HIDDEN = 32
    NUM_CLASSES = 4     # dataset.num_classes
    NUM_LAYERS = 2      # -> pooling branch never taken in forward

    key = jax.random.PRNGKey(0)
    k1, k2 = jax.random.split(key)

    # 1) tiny case (single grid step per axis)
    _run_case(k1, n_nodes=16, num_features=NUM_FEATURES, hidden=HIDDEN,
              num_classes=NUM_CLASSES, num_graphs=2)
    # 2) larger case: npad=384 -> multi-step row (parallel) and reduction
    #    (arbitrary) axes are actually exercised, incl. accumulator init/finalize
    _run_case(k2, n_nodes=384, num_features=NUM_FEATURES, hidden=HIDDEN,
              num_classes=NUM_CLASSES, num_graphs=3)

    print("KERNEL_OK")
</pallas_src>

<mosaic_0001>
module attributes {stable_mosaic.version = 11 : i64} {
  func.func @_gconv_kernel(%arg0: i32, %arg1: i32, %arg2: memref<128x128xbf16, #tpu.memory_space<vmem>>, %arg3: memref<128x128xbf16, #tpu.memory_space<vmem>>, %arg4: memref<128x128xbf16, #tpu.memory_space<vmem>>, %arg5: memref<128x128xf32, #tpu.memory_space<vmem>>, %arg6: memref<128x128xf32, #tpu.memory_space<vmem>>, %arg7: memref<1x128xf32, #tpu.memory_space<vmem>>, %arg8: memref<128x128xbf16, #tpu.memory_space<vmem>>, %arg9: memref<128x128xf32, #tpu.memory_space<vmem>>) attributes {dimension_semantics = [#tpu.dimension_semantics<parallel>, #tpu.dimension_semantics<arbitrary>], iteration_bounds = array<i64: 1, 1>, scalar_prefetch = 0 : i64, scratch_operands = 1 : i64, tpu.core_type = #tpu.core_type<tc>, window_params = [{transform_indices = @transform_0, window_bounds = array<i64: 128, 128>}, {transform_indices = @transform_1, window_bounds = array<i64: 128, 128>}, {transform_indices = @transform_2, window_bounds = array<i64: 128, 128>}, {pipeline_mode = #tpu.pipeline_mode<synchronous>, transform_indices = @transform_3, window_bounds = array<i64: 128, 128>}, {pipeline_mode = #tpu.pipeline_mode<synchronous>, transform_indices = @transform_4, window_bounds = array<i64: 128, 128>}, {pipeline_mode = #tpu.pipeline_mode<synchronous>, transform_indices = @transform_5, window_bounds = array<i64: 1, 128>}, {transform_indices = @transform_6, window_bounds = array<i64: 128, 128>}]} {
    %c0_i32 = arith.constant 0 : i32
    %0 = arith.cmpi eq, %arg1, %c0_i32 : i32
    %1 = arith.extui %0 : i1 to i32
    %c0_i32_0 = arith.constant 0 : i32
    %2 = arith.cmpi ne, %1, %c0_i32_0 : i32
    scf.if %2 {
      %cst_10 = arith.constant 0.000000e+00 : f32
      %12 = vector.broadcast %cst_10 : f32 to vector<128x128xf32>
      %c0_11 = arith.constant 0 : index
      %c0_12 = arith.constant 0 : index
      %13 = vector.load %arg9[%c0_11, %c0_12] : memref<128x128xf32, #tpu.memory_space<vmem>>, vector<128x128xf32>
      tpu.vector_store %arg9[%c0_11, %c0_12], %12 {strides = array<i32>} : memref<128x128xf32, #tpu.memory_space<vmem>>, vector<128x128xf32>,
    } else {
    }
    %c0 = arith.constant 0 : index
    %c0_1 = arith.constant 0 : index
    %3 = vector.load %arg9[%c0, %c0_1] : memref<128x128xf32, #tpu.memory_space<vmem>>, vector<128x128xf32>
    %c0_2 = arith.constant 0 : index
    %c0_3 = arith.constant 0 : index
    %4 = vector.load %arg2[%c0_2, %c0_3] : memref<128x128xbf16, #tpu.memory_space<vmem>>, vector<128x128xbf16>
    %c0_4 = arith.constant 0 : index
    %c0_5 = arith.constant 0 : index
    %5 = vector.load %arg3[%c0_4, %c0_5] : memref<128x128xbf16, #tpu.memory_space<vmem>>, vector<128x128xbf16>
    %cst = arith.constant dense<0.000000e+00> : vector<128x128xf32>
    %6 = tpu.matmul %4, %5, %cst {dimension_numbers = #tpu.dot_dimension_numbers<[1], [0], [0], [1], [0, 0, 1, 1], [], []>} : vector<128x128xbf16>, vector<128x128xbf16>, vector<128x128xf32> -> vector<128x128xf32>
    %7 = arith.addf %3, %6 : vector<128x128xf32>
    %c0_6 = arith.constant 0 : index
    %c0_7 = arith.constant 0 : index
    %8 = vector.load %arg9[%c0_6, %c0_7] : memref<128x128xf32, #tpu.memory_space<vmem>>, vector<128x128xf32>
    tpu.vector_store %arg9[%c0_6, %c0_7], %7 {strides = array<i32>} : memref<128x128xf32, #tpu.memory_space<vmem>>, vector<128x128xf32>,
    %c0_i32_8 = arith.constant 0 : i32
    %9 = arith.cmpi eq, %arg1, %c0_i32_8 : i32
    %10 = arith.extui %9 : i1 to i32
    %c0_i32_9 = arith.constant 0 : i32
    %11 = arith.cmpi ne, %10, %c0_i32_9 : i32
    scf.if %11 {
      %c0_10 = arith.constant 0 : index
      %c0_11 = arith.constant 0 : index
      %12 = vector.load %arg9[%c0_10, %c0_11] : memref<128x128xf32, #tpu.memory_space<vmem>>, vector<128x128xf32>
      %13 = vector.extract_strided_slice %12 {offsets = [0, 127], sizes = [128, 1], strides = [1, 1]} : vector<128x128xf32> to vector<128x1xf32>
      %cst_12 = arith.constant 1.000000e+00 : f32
      %14 = vector.broadcast %cst_12 : f32 to vector<128x1xf32>
      %15 = arith.maximumf %13, %14 : vector<128x1xf32>
      %16 = tpu.reciprocal %15 {approx = true} : vector<128x1xf32> -> vector<128x1xf32>
      %17 = vector.broadcast %16 : vector<128x1xf32> to vector<128x128xf32>
      %18 = arith.mulf %12, %17 : vector<128x128xf32>
      %c0_13 = arith.constant 0 : index
      %c0_14 = arith.constant 0 : index
      %19 = vector.load %arg5[%c0_13, %c0_14] : memref<128x128xf32, #tpu.memory_space<vmem>>, vector<128x128xf32>
      %cst_15 = arith.constant dense<0.000000e+00> : vector<128x128xf32>
      %20 = tpu.matmul %18, %19, %cst_15 {dimension_numbers = #tpu.dot_dimension_numbers<[1], [0], [0], [1], [0, 0, 1, 1], [], []>} : vector<128x128xf32>, vector<128x128xf32>, vector<128x128xf32> -> vector<128x128xf32>
      %c0_16 = arith.constant 0 : index
      %c0_17 = arith.constant 0 : index
      %21 = vector.load %arg4[%c0_16, %c0_17] : memref<128x128xbf16, #tpu.memory_space<vmem>>, vector<128x128xbf16>
      %22 = arith.extf %21 : vector<128x128xbf16> to vector<128x128xf32>
      %c0_18 = arith.constant 0 : index
      %c0_19 = arith.constant 0 : index
      %23 = vector.load %arg6[%c0_18, %c0_19] : memref<128x128xf32, #tpu.memory_space<vmem>>, vector<128x128xf32>
      %cst_20 = arith.constant dense<0.000000e+00> : vector<128x128xf32>
      %24 = tpu.matmul %22, %23, %cst_20 {dimension_numbers = #tpu.dot_dimension_numbers<[1], [0], [0], [1], [0, 0, 1, 1], [], []>} : vector<128x128xf32>, vector<128x128xf32>, vector<128x128xf32> -> vector<128x128xf32>
      %25 = arith.addf %20, %24 : vector<128x128xf32>
      %c0_21 = arith.constant 0 : index
      %c0_22 = arith.constant 0 : index
      %26 = vector.load %arg7[%c0_21, %c0_22] : memref<1x128xf32, #tpu.memory_space<vmem>>, vector<1x128xf32>
      %27 = vector.broadcast %26 : vector<1x128xf32> to vector<128x128xf32>
      %28 = arith.addf %25, %27 : vector<128x128xf32>
      %cst_23 = arith.constant 0.000000e+00 : f32
      %29 = vector.broadcast %cst_23 : f32 to vector<128x128xf32>
      %30 = arith.maximumf %28, %29 : vector<128x128xf32>
      %31 = tpu.iota {dimensions = array<i32: 1>} : vector<128x128xi32>
      %c127_i32 = arith.constant 127 : i32
      %32 = vector.broadcast %c127_i32 : i32 to vector<128x128xi32>
      %33 = arith.cmpi eq, %31, %32 : vector<128x128xi32>
      %cst_24 = arith.constant 1.000000e+00 : f32
      %34 = vector.broadcast %cst_24 : f32 to vector<128x128xf32>
      %35 = arith.select %33, %34, %30 : vector<128x128xi1>, vector<128x128xf32>
      %36 = arith.truncf %35 : vector<128x128xf32> to vector<128x128xbf16>
      %c0_25 = arith.constant 0 : index
      %c0_26 = arith.constant 0 : index
      %37 = vector.load %arg8[%c0_25, %c0_26] : memref<128x128xbf16, #tpu.memory_space<vmem>>, vector<128x128xbf16>
      tpu.vector_store %arg8[%c0_25, %c0_26], %36 {strides = array<i32>} : memref<128x128xbf16, #tpu.memory_space<vmem>>, vector<128x128xbf16>,
    } else {
    }
    return
  }
  func.func @transform_0(%arg0: i32, %arg1: i32) -> (i32, i32) {
    %c0_i32 = arith.constant 0 : i32
    return %arg0, %arg1 : i32, i32
  }
  func.func @transform_1(%arg0: i32, %arg1: i32) -> (i32, i32) {
    %c0_i32 = arith.constant 0 : i32
    %c0_i32_0 = arith.constant 0 : i32
    return %arg1, %c0_i32 : i32, i32
  }
  func.func @transform_2(%arg0: i32, %arg1: i32) -> (i32, i32) {
    %c0_i32 = arith.constant 0 : i32
    %c0_i32_0 = arith.constant 0 : i32
    return %arg0, %c0_i32 : i32, i32
  }
  func.func @transform_3(%arg0: i32, %arg1: i32) -> (i32, i32) {
    %c0_i32 = arith.constant 0 : i32
    %c0_i32_0 = arith.constant 0 : i32
    %c0_i32_1 = arith.constant 0 : i32
    return %c0_i32, %c0_i32_0 : i32, i32
  }
  func.func @transform_4(%arg0: i32, %arg1: i32) -> (i32, i32) {
    %c0_i32 = arith.constant 0 : i32
    %c0_i32_0 = arith.constant 0 : i32
    %c0_i32_1 = arith.constant 0 : i32
    return %c0_i32, %c0_i32_0 : i32, i32
  }
  func.func @transform_5(%arg0: i32, %arg1: i32) -> (i32, i32) {
    %c0_i32 = arith.constant 0 : i32
    %c0_i32_0 = arith.constant 0 : i32
    %c0_i32_1 = arith.constant 0 : i32
    return %c0_i32, %c0_i32_0 : i32, i32
  }
  func.func @transform_6(%arg0: i32, %arg1: i32) -> (i32, i32) {
    %c0_i32 = arith.constant 0 : i32
    %c0_i32_0 = arith.constant 0 : i32
    return %arg0, %c0_i32 : i32, i32
  }
}

</mosaic_0001>

<llo_original>
// kernel: tpu_custom_call.1
$region0: #{tpu_custom_call.1}
  #allocation0 [shape = 'u32[]', space=smem, size = 0x4, offset = 0x4, fixed_abs, tag = 'smem constant byte address 0x4 - core index']
  #allocation1 [shape = 'u32[72,128]{1,0:T(1,128)}', space=vmem, size = 0x9000, scoped, tag = 'internal scratch']
  #allocation2 [shape = 'f32[128,128]{1,0:T(8,128)}', space=vmem, size = 0x10000, scoped, tag = 'scratch operand']
  %s0 = inlined_call_operand.hbm [shape: bf16[128,128], index: 0, kind: input, shape index: {}]
  %s1 = inlined_call_operand.hbm [shape: bf16[128,128], index: 1, kind: input, shape index: {}]
  %s2 = inlined_call_operand.hbm [shape: bf16[128,128], index: 2, kind: input, shape index: {}]
  %s3 = inlined_call_operand.hbm [shape: f32[128,128], index: 3, kind: input, shape index: {}]
  %s4 = inlined_call_operand.hbm [shape: f32[128,128], index: 4, kind: input, shape index: {}]
  %s5 = inlined_call_operand.vmem [shape: f32[1,128], index: 5, kind: input, shape index: {}]
  %s6 = inlined_call_operand.hbm [shape: bf16[128,128], index: 6, kind: output, shape index: {}]
  %s7 = sld [smem:[#allocation0]]
  $region62: #{tpu_custom_call.1} parent=0
    _
  %s9 = ssub.s32 1, %s7
  %s10 = scalar_select 0, %s9, %s7
  $region1: #{tpu_custom_call.1} parent=0
    #allocation3 [shape = 'u8[32768]{0}', space=vmem, size = 0x8000, scoped, tag = 'input window, operand 0, single buffered']
    #allocation4 [shape = 's32[1]{0}', space=sflag, size = 0x4, scoped, tag = 'scoped memory for tpu_custom_call.1']
    #allocation5 [shape = 's32[1]{0}', space=sflag, size = 0x4, scoped, tag = 'scoped memory for tpu_custom_call.1']
    #allocation6 [shape = 'u8[32768]{0}', space=vmem, size = 0x8000, scoped, tag = 'input window, operand 1, single buffered']
    #allocation7 [shape = 's32[1]{0}', space=sflag, size = 0x4, scoped, tag = 'scoped memory for tpu_custom_call.1']
    #allocation8 [shape = 'u8[32768]{0}', space=vmem, size = 0x8000, scoped, tag = 'input window, operand 2, single buffered']
    #allocation9 [shape = 'u8[65536]{0}', space=vmem, size = 0x10000, scoped, tag = 'input window, operand 3, single buffered']
    #allocation10 [shape = 's32[1]{0}', space=sflag, size = 0x4, scoped, tag = 'scoped memory for tpu_custom_call.1']
    #allocation11 [shape = 'u8[65536]{0}', space=vmem, size = 0x10000, scoped, tag = 'input window, operand 4, single buffered']
    #allocation12 [shape = 'u8[32768]{0}', space=vmem, size = 0x8000, scoped, tag = 'output window, operand 0, single buffered']
    %11 = vsyncpa [#allocation4], 0
    %12 = vsyncpa [#allocation7], 0
    %13 = vsyncpa [#allocation10], 0
    %14 = vsyncpa [#allocation5], 0
    // Predicated region
    $region2: #{tpu_custom_call.1} parent=1 // pred_check
      _
    $region3: #{tpu_custom_call.1} parent=1 // pred_check_branch
      %16 = sbr.rel (0) target = $region5
    $region4: #{tpu_custom_call.1} parent=1 // pred_region
      %18 = vsyncadd [#allocation4], 0
      %s19 = sshll.u32 %s0, 4
      %s20 = int_to_ptr.hbm [resolvable:$true] %s19
      %s21 = sshll.u32 [#allocation3], 4
      %s22 = int_to_ptr.vmem [resolvable:$true] %s21
      %27 = dma.hbm_to_vmem [thread:$0]  %s20, 1024, %s22, [#allocation4], 64, 64, 4
    $region5: #{tpu_custom_call.1} parent=1 // pred_fallthru
      _
    // Predicated region
    $region6: #{tpu_custom_call.1} parent=1 // pred_check
      _
    $region7: #{tpu_custom_call.1} parent=1 // pred_check_branch
      %29 = sbr.rel (0) target = $region9
    $region8: #{tpu_custom_call.1} parent=1 // pred_region
      %31 = vsyncadd [#allocation7], 0
      %s32 = sshll.u32 %s1, 4
      %s33 = int_to_ptr.hbm [resolvable:$true] %s32
      %s34 = sshll.u32 [#allocation6], 4
      %s35 = int_to_ptr.vmem [resolvable:$true] %s34
      %40 = dma.hbm_to_vmem [thread:$0]  %s33, 1024, %s35, [#allocation7], 64, 64, 4
    $region9: #{tpu_custom_call.1} parent=1 // pred_fallthru
      _
    // Predicated region
    $region10: #{tpu_custom_call.1} parent=1 // pred_check
      _
    $region11: #{tpu_custom_call.1} parent=1 // pred_check_branch
      %42 = sbr.rel (0) target = $region13
    $region12: #{tpu_custom_call.1} parent=1 // pred_region
      %44 = vsyncadd [#allocation7], 0
      %s45 = sshll.u32 %s2, 4
      %s46 = int_to_ptr.hbm [resolvable:$true] %s45
      %s47 = sshll.u32 [#allocation8], 4
      %s48 = int_to_ptr.vmem [resolvable:$true] %s47
      %53 = dma.hbm_to_vmem [thread:$0]  %s46, 1024, %s48, [#allocation7], 64, 64, 4
    $region13: #{tpu_custom_call.1} parent=1 // pred_fallthru
      _
    // Predicated region
    $region14: #{tpu_custom_call.1} parent=1 // pred_check
      _
    $region15: #{tpu_custom_call.1} parent=1 // pred_check_branch
      %55 = sbr.rel (0) target = $region17
    $region16: #{tpu_custom_call.1} parent=1 // pred_region
      %57 = vsyncadd [#allocation10], 0
      %s58 = sshll.u32 %s3, 4
      %s59 = int_to_ptr.hbm [resolvable:$true] %s58
      %s60 = sshll.u32 [#allocation9], 4
      %s61 = int_to_ptr.vmem [resolvable:$true] %s60
      %66 = dma.hbm_to_vmem [thread:$0]  %s59, 2048, %s61, [#allocation10], 128, 128, 8
    $region17: #{tpu_custom_call.1} parent=1 // pred_fallthru
      _
    // Predicated region
    $region18: #{tpu_custom_call.1} parent=1 // pred_check
      _
    $region19: #{tpu_custom_call.1} parent=1 // pred_check_branch
      %68 = sbr.rel (0) target = $region21
    $region20: #{tpu_custom_call.1} parent=1 // pred_region
      %70 = vsyncadd [#allocation10], 0
      %s71 = sshll.u32 %s4, 4
      %s72 = int_to_ptr.hbm [resolvable:$true] %s71
      %s73 = sshll.u32 [#allocation11], 4
      %s74 = int_to_ptr.vmem [resolvable:$true] %s73
      %79 = dma.hbm_to_vmem [thread:$0]  %s72, 2048, %s74, [#allocation10], 128, 128, 8
    $region21: #{tpu_custom_call.1} parent=1 // pred_fallthru
      _
    // Predicated region
    $region22: #{tpu_custom_call.1} parent=1 // pred_check
      _
    $region23: #{tpu_custom_call.1} parent=1 // pred_check_branch
      %81 = sbr.rel (0) target = $region25
    $region24: #{tpu_custom_call.1} parent=1 // pred_region
      _
    $region25: #{tpu_custom_call.1} parent=1 // pred_fallthru
      _
    // Predicated region
    $region26: #{tpu_custom_call.1} parent=1 // pred_check
      _
    $region27: #{tpu_custom_call.1} parent=1 // pred_check_branch
      %83 = sbr.rel (0) target = $region29
    $region28: #{tpu_custom_call.1} parent=1 // pred_region
      %85 = dma.done [#allocation4], 1024
    $region29: #{tpu_custom_call.1} parent=1 // pred_fallthru
      _
    // Predicated region
    $region30: #{tpu_custom_call.1} parent=1 // pred_check
      _
    $region31: #{tpu_custom_call.1} parent=1 // pred_check_branch
      %87 = sbr.rel (0) target = $region33
    $region32: #{tpu_custom_call.1} parent=1 // pred_region
      %89 = dma.done [#allocation7], 1024
    $region33: #{tpu_custom_call.1} parent=1 // pred_fallthru
      _
    // Predicated region
    $region34: #{tpu_custom_call.1} parent=1 // pred_check
      _
    $region35: #{tpu_custom_call.1} parent=1 // pred_check_branch
      %91 = sbr.rel (0) target = $region37
    $region36: #{tpu_custom_call.1} parent=1 // pred_region
      %93 = dma.done [#allocation7], 1024
    $region37: #{tpu_custom_call.1} parent=1 // pred_fallthru
      _
    // Predicated region
    $region38: #{tpu_custom_call.1} parent=1 // pred_check
      _
    $region39: #{tpu_custom_call.1} parent=1 // pred_check_branch
      %95 = sbr.rel (0) target = $region41
    $region40: #{tpu_custom_call.1} parent=1 // pred_region
      %97 = dma.done [#allocation10], 2048
    $region41: #{tpu_custom_call.1} parent=1 // pred_fallthru
      _
    // Predicated region
    $region42: #{tpu_custom_call.1} parent=1 // pred_check
      _
    $region43: #{tpu_custom_call.1} parent=1 // pred_check_branch
      %99 = sbr.rel (0) target = $region45
    $region44: #{tpu_custom_call.1} parent=1 // pred_region
      %101 = dma.done [#allocation10], 2048
    $region45: #{tpu_custom_call.1} parent=1 // pred_fallthru
      _
    %p102 = scmp.eq.s32.totalorder 0, 0
    // Predicated region
    $region46: #{tpu_custom_call.1} parent=1 // pred_check
      %p103 = pneg %p102
    $region47: #{tpu_custom_call.1} parent=1 // pred_check_branch
      %105 = sbr.rel (%p103) target = $region49
    $region48: #{tpu_custom_call.1} parent=1 // pred_region
      %106 = vst [vmem:[#allocation2] sm:$0xff] 0.0
      %107 = vst [vmem:[#allocation2 + $0x8] sm:$0xff] 0.0
      %108 = vst [vmem:[#allocation2 + $0x10] sm:$0xff] 0.0
      %109 = vst [vmem:[#allocation2 + $0x18] sm:$0xff] 0.0
      %110 = vst [vmem:[#allocation2 + $0x20] sm:$0xff] 0.0
      %111 = vst [vmem:[#allocation2 + $0x28] sm:$0xff] 0.0
      %112 = vst [vmem:[#allocation2 + $0x30] sm:$0xff] 0.0
      %113 = vst [vmem:[#allocation2 + $0x38] sm:$0xff] 0.0
      %114 = vst [vmem:[#allocation2 + $0x40] sm:$0xff] 0.0
      %115 = vst [vmem:[#allocation2 + $0x48] sm:$0xff] 0.0
      %116 = vst [vmem:[#allocation2 + $0x50] sm:$0xff] 0.0
      %117 = vst [vmem:[#allocation2 + $0x58] sm:$0xff] 0.0
      %118 = vst [vmem:[#allocation2 + $0x60] sm:$0xff] 0.0
      %119 = vst [vmem:[#allocation2 + $0x68] sm:$0xff] 0.0
      %120 = vst [vmem:[#allocation2 + $0x70] sm:$0xff] 0.0
      %121 = vst [vmem:[#allocation2 + $0x78] sm:$0xff] 0.0
    $region49: #{tpu_custom_call.1} parent=1 // pred_fallthru
      _
    %v122 = vld [vmem:[#allocation2] sm:$0xff]
    %v123 = vld [vmem:[#allocation2 + $0x8] sm:$0xff]
    %v124 = vld [vmem:[#allocation2 + $0x10] sm:$0xff]
    %v125 = vld [vmem:[#allocation2 + $0x18] sm:$0xff]
    %v126 = vld [vmem:[#allocation2 + $0x20] sm:$0xff]
    %v127 = vld [vmem:[#allocation2 + $0x28] sm:$0xff]
    %v128 = vld [vmem:[#allocation2 + $0x30] sm:$0xff]
    %v129 = vld [vmem:[#allocation2 + $0x38] sm:$0xff]
    %v130 = vld [vmem:[#allocation2 + $0x40] sm:$0xff]
    %v131 = vld [vmem:[#allocation2 + $0x48] sm:$0xff]
    %v132 = vld [vmem:[#allocation2 + $0x50] sm:$0xff]
    %v133 = vld [vmem:[#allocation2 + $0x58] sm:$0xff]
    %v134 = vld [vmem:[#allocation2 + $0x60] sm:$0xff]
    %v135 = vld [vmem:[#allocation2 + $0x68] sm:$0xff]
    %v136 = vld [vmem:[#allocation2 + $0x70] sm:$0xff]
    %v137 = vld [vmem:[#allocation2 + $0x78] sm:$0xff]
    %v138 = vld [vmem:[#allocation3] sm:$0xf]
    %v139 = vld [vmem:[#allocation3 + $0x4] sm:$0xf]
    %v140 = vld [vmem:[#allocation3 + $0x8] sm:$0xf]
    %v141 = vld [vmem:[#allocation3 + $0xc] sm:$0xf]
    %v142 = vld [vmem:[#allocation3 + $0x10] sm:$0xf]
    %v143 = vld [vmem:[#allocation3 + $0x14] sm:$0xf]
    %v144 = vld [vmem:[#allocation3 + $0x18] sm:$0xf]
    %v145 = vld [vmem:[#allocation3 + $0x1c] sm:$0xf]
    %v146 = vld [vmem:[#allocation3 + $0x20] sm:$0xf]
    %v147 = vld [vmem:[#allocation3 + $0x24] sm:$0xf]
    %v148 = vld [vmem:[#allocation3 + $0x28] sm:$0xf]
    %v149 = vld [vmem:[#allocation3 + $0x2c] sm:$0xf]
    %v150 = vld [vmem:[#allocation3 + $0x30] sm:$0xf]
    %v151 = vld [vmem:[#allocation3 + $0x34] sm:$0xf]
    %v152 = vld [vmem:[#allocation3 + $0x38] sm:$0xf]
    %v153 = vld [vmem:[#allocation3 + $0x3c] sm:$0xf]
    %v154 = vld [vmem:[#allocation6] sm:$0xf]
    %v155 = vld [vmem:[#allocation6 + $0x4] sm:$0xf]
    %v156 = vld [vmem:[#allocation6 + $0x8] sm:$0xf]
    %v157 = vld [vmem:[#allocation6 + $0xc] sm:$0xf]
    %v158 = vld [vmem:[#allocation6 + $0x10] sm:$0xf]
    %v159 = vld [vmem:[#allocation6 + $0x14] sm:$0xf]
    %v160 = vld [vmem:[#allocation6 + $0x18] sm:$0xf]
    %v161 = vld [vmem:[#allocation6 + $0x1c] sm:$0xf]
    %v162 = vld [vmem:[#allocation6 + $0x20] sm:$0xf]
    %v163 = vld [vmem:[#allocation6 + $0x24] sm:$0xf]
    %v164 = vld [vmem:[#allocation6 + $0x28] sm:$0xf]
    %v165 = vld [vmem:[#allocation6 + $0x2c] sm:$0xf]
    %v166 = vld [vmem:[#allocation6 + $0x30] sm:$0xf]
    %v167 = vld [vmem:[#allocation6 + $0x34] sm:$0xf]
    %v168 = vld [vmem:[#allocation6 + $0x38] sm:$0xf]
    %v169 = vld [vmem:[#allocation6 + $0x3c] sm:$0xf]
    %v186 = vunpack.c.l.b16 %v138
    %v187 = vunpack.c.l.b16 %v139
    %v188 = vunpack.c.l.b16 %v140
    %v189 = vunpack.c.l.b16 %v141
    %v190 = vunpack.c.l.b16 %v142
    %v191 = vunpack.c.l.b16 %v143
    %v192 = vunpack.c.l.b16 %v144
    %v193 = vunpack.c.l.b16 %v145
    %v194 = vunpack.c.l.b16 %v146
    %v195 = vunpack.c.l.b16 %v147
    %v196 = vunpack.c.l.b16 %v148
    %v197 = vunpack.c.l.b16 %v149
    %v198 = vunpack.c.l.b16 %v150
    %v199 = vunpack.c.l.b16 %v151
    %v200 = vunpack.c.l.b16 %v152
    %v201 = vunpack.c.l.b16 %v153
    %v202 = vpack.c.b16 %v187, %v186
    %v203 = vpack.c.b16 %v189, %v188
    %v204 = vpack.c.b16 %v191, %v190
    %v205 = vpack.c.b16 %v193, %v192
    %v206 = vpack.c.b16 %v195, %v194
    %v207 = vpack.c.b16 %v197, %v196
    %v208 = vpack.c.b16 %v199, %v198
    %v209 = vpack.c.b16 %v201, %v200
    %v234 = vunpack.c.l.b16 %v154
    %v235 = vunpack.c.l.b16 %v155
    %v236 = vunpack.c.l.b16 %v156
    %v237 = vunpack.c.l.b16 %v157
    %v238 = vunpack.c.l.b16 %v158
    %v239 = vunpack.c.l.b16 %v159
    %v240 = vunpack.c.l.b16 %v160
    %v241 = vunpack.c.l.b16 %v161
    %v242 = vunpack.c.l.b16 %v162
    %v243 = vunpack.c.l.b16 %v163
    %v244 = vunpack.c.l.b16 %v164
    %v245 = vunpack.c.l.b16 %v165
    %v246 = vunpack.c.l.b16 %v166
    %v247 = vunpack.c.l.b16 %v167
    %v248 = vunpack.c.l.b16 %v168
    %v249 = vunpack.c.l.b16 %v169
    %v250 = vpack.c.b16 %v235, %v234
    %v251 = vpack.c.b16 %v237, %v236
    %v252 = vpack.c.b16 %v239, %v238
    %v253 = vpack.c.b16 %v241, %v240
    %v254 = vpack.c.b16 %v243, %v242
    %v255 = vpack.c.b16 %v245, %v244
    %v256 = vpack.c.b16 %v247, %v246
    %v257 = vpack.c.b16 %v249, %v248
    %266 = vmatpush.bf16.msra.mxu0 %v257
    %267 = vmatpush.bf16.msra.mxu0 %v256
    %268 = vmatpush.bf16.msra.mxu0 %v255
    %269 = vmatpush.bf16.msra.mxu0 %v254
    %270 = vmatpush.bf16.msra.mxu0 %v253
    %271 = vmatpush.bf16.msra.mxu0 %v252
    %272 = vmatpush.bf16.msra.mxu0 %v251
    %273 = vmatpush.bf16.msra.mxu0 %v250
    %274 = vmatmul.bf16.gmra.mxu0 %v202
    %v275 = vpop.f32.mrf.mxu0
    %v276 = vadd.f32 0.0, %v275
    %v277 = vpop.f32.mrf.mxu0
    %v278 = vadd.f32 0.0, %v277
    %279 = vmatmul.bf16.gmra.mxu0 %v203
    %v280 = vpop.f32.mrf.mxu0
    %v281 = vadd.f32 0.0, %v280
    %v282 = vpop.f32.mrf.mxu0
    %v283 = vadd.f32 0.0, %v282
    %284 = vmatmul.bf16.gmra.mxu0 %v204
    %v285 = vpop.f32.mrf.mxu0
    %v286 = vadd.f32 0.0, %v285
    %v287 = vpop.f32.mrf.mxu0
    %v288 = vadd.f32 0.0, %v287
    %289 = vmatmul.bf16.gmra.mxu0 %v205
    %v290 = vpop.f32.mrf.mxu0
    %v291 = vadd.f32 0.0, %v290
    %v292 = vpop.f32.mrf.mxu0
    %v293 = vadd.f32 0.0, %v292
    %294 = vmatmul.bf16.gmra.mxu0 %v206
    %v295 = vpop.f32.mrf.mxu0
    %v296 = vadd.f32 0.0, %v295
    %v297 = vpop.f32.mrf.mxu0
    %v298 = vadd.f32 0.0, %v297
    %299 = vmatmul.bf16.gmra.mxu0 %v207
    %v300 = vpop.f32.mrf.mxu0
    %v301 = vadd.f32 0.0, %v300
    %v302 = vpop.f32.mrf.mxu0
    %v303 = vadd.f32 0.0, %v302
    %304 = vmatmul.bf16.gmra.mxu0 %v208
    %v305 = vpop.f32.mrf.mxu0
    %v306 = vadd.f32 0.0, %v305
    %v307 = vpop.f32.mrf.mxu0
    %v308 = vadd.f32 0.0, %v307
    %309 = vmatmul.bf16.gmra.mxu0 %v209
    %v310 = vpop.f32.mrf.mxu0
    %v311 = vadd.f32 0.0, %v310
    %v312 = vpop.f32.mrf.mxu0
    %v313 = vadd.f32 0.0, %v312
    %314 = vdwg.mxu0
    %v315 = vadd.f32 %v122, %v276
    %v316 = vadd.f32 %v123, %v278
    %v317 = vadd.f32 %v124, %v281
    %v318 = vadd.f32 %v125, %v283
    %v319 = vadd.f32 %v126, %v286
    %v320 = vadd.f32 %v127, %v288
    %v321 = vadd.f32 %v128, %v291
    %v322 = vadd.f32 %v129, %v293
    %v323 = vadd.f32 %v130, %v296
    %v324 = vadd.f32 %v131, %v298
    %v325 = vadd.f32 %v132, %v301
    %v326 = vadd.f32 %v133, %v303
    %v327 = vadd.f32 %v134, %v306
    %v328 = vadd.f32 %v135, %v308
    %v329 = vadd.f32 %v136, %v311
    %v330 = vadd.f32 %v137, %v313
    %331 = vst [vmem:[#allocation2] sm:$0xff] %v315
    %332 = vst [vmem:[#allocation2 + $0x8] sm:$0xff] %v316
    %333 = vst [vmem:[#allocation2 + $0x10] sm:$0xff] %v317
    %334 = vst [vmem:[#allocation2 + $0x18] sm:$0xff] %v318
    %335 = vst [vmem:[#allocation2 + $0x20] sm:$0xff] %v319
    %336 = vst [vmem:[#allocation2 + $0x28] sm:$0xff] %v320
    %337 = vst [vmem:[#allocation2 + $0x30] sm:$0xff] %v321
    %338 = vst [vmem:[#allocation2 + $0x38] sm:$0xff] %v322
    %339 = vst [vmem:[#allocation2 + $0x40] sm:$0xff] %v323
    %340 = vst [vmem:[#allocation2 + $0x48] sm:$0xff] %v324
    %341 = vst [vmem:[#allocation2 + $0x50] sm:$0xff] %v325
    %342 = vst [vmem:[#allocation2 + $0x58] sm:$0xff] %v326
    %343 = vst [vmem:[#allocation2 + $0x60] sm:$0xff] %v327
    %344 = vst [vmem:[#allocation2 + $0x68] sm:$0xff] %v328
    %345 = vst [vmem:[#allocation2 + $0x70] sm:$0xff] %v329
    %346 = vst [vmem:[#allocation2 + $0x78] sm:$0xff] %v330
    // Predicated region
    $region50: #{tpu_custom_call.1} parent=1 // pred_check
      %p347 = pneg %p102
    $region51: #{tpu_custom_call.1} parent=1 // pred_check_branch
      %349 = sbr.rel (%p347) target = $region53
    $region52: #{tpu_custom_call.1} parent=1 // pred_region
      %v350 = vld [vmem:[#allocation2] sm:$0xff]
      %v351 = vld [vmem:[#allocation2 + $0x8] sm:$0xff]
      %v352 = vld [vmem:[#allocation2 + $0x10] sm:$0xff]
      %v353 = vld [vmem:[#allocation2 + $0x18] sm:$0xff]
      %v354 = vld [vmem:[#allocation2 + $0x20] sm:$0xff]
      %v355 = vld [vmem:[#allocation2 + $0x28] sm:$0xff]
      %v356 = vld [vmem:[#allocation2 + $0x30] sm:$0xff]
      %v357 = vld [vmem:[#allocation2 + $0x38] sm:$0xff]
      %v358 = vld [vmem:[#allocation2 + $0x40] sm:$0xff]
      %v359 = vld [vmem:[#allocation2 + $0x48] sm:$0xff]
      %v360 = vld [vmem:[#allocation2 + $0x50] sm:$0xff]
      %v361 = vld [vmem:[#allocation2 + $0x58] sm:$0xff]
      %v362 = vld [vmem:[#allocation2 + $0x60] sm:$0xff]
      %v363 = vld [vmem:[#allocation2 + $0x68] sm:$0xff]
      %v364 = vld [vmem:[#allocation2 + $0x70] sm:$0xff]
      %v365 = vld [vmem:[#allocation2 + $0x78] sm:$0xff]
      %v366 = vmax.f32 %v350, 1.0
      %v367 = vmax.f32 %v351, 1.0
      %v368 = vmax.f32 %v352, 1.0
      %v369 = vmax.f32 %v353, 1.0
      %v370 = vmax.f32 %v354, 1.0
      %v371 = vmax.f32 %v355, 1.0
      %v372 = vmax.f32 %v356, 1.0
      %v373 = vmax.f32 %v357, 1.0
      %v374 = vmax.f32 %v358, 1.0
      %v375 = vmax.f32 %v359, 1.0
      %v376 = vmax.f32 %v360, 1.0
      %v377 = vmax.f32 %v361, 1.0
      %v378 = vmax.f32 %v362, 1.0
      %v379 = vmax.f32 %v363, 1.0
      %v380 = vmax.f32 %v364, 1.0
      %v381 = vmax.f32 %v365, 1.0
      %v382 = vrcp.pop %v366
      %v383 = vrcp.pop %v367
      %v384 = vrcp.pop %v368
      %v385 = vrcp.pop %v369
      %v386 = vrcp.pop %v370
      %v387 = vrcp.pop %v371
      %v388 = vrcp.pop %v372
      %v389 = vrcp.pop %v373
      %v390 = vrcp.pop %v374
      %v391 = vrcp.pop %v375
      %v392 = vrcp.pop %v376
      %v393 = vrcp.pop %v377
      %v394 = vrcp.pop %v378
      %v395 = vrcp.pop %v379
      %v396 = vrcp.pop %v380
      %v397 = vrcp.pop %v381
      %399 = vset.pattern.permute.xlu0 127
      %400 = vperm.xlu0 %399, %v382
      %v401 = vpop.permute.xlu0 %400
      %404 = vset.pattern.permute.xlu0 127
      %405 = vperm.xlu0 %404, %v383
      %v406 = vpop.permute.xlu0 %405
      %409 = vset.pattern.permute.xlu0 127
      %410 = vperm.xlu0 %409, %v384
      %v411 = vpop.permute.xlu0 %410
      %414 = vset.pattern.permute.xlu0 127
      %415 = vperm.xlu0 %414, %v385
      %v416 = vpop.permute.xlu0 %415
      %419 = vset.pattern.permute.xlu0 127
      %420 = vperm.xlu0 %419, %v386
      %v421 = vpop.permute.xlu0 %420
      %424 = vset.pattern.permute.xlu0 127
      %425 = vperm.xlu0 %424, %v387
      %v426 = vpop.permute.xlu0 %425
      %429 = vset.pattern.permute.xlu0 127
      %430 = vperm.xlu0 %429, %v388
      %v431 = vpop.permute.xlu0 %430
      %434 = vset.pattern.permute.xlu0 127
      %435 = vperm.xlu0 %434, %v389
      %v436 = vpop.permute.xlu0 %435
      %439 = vset.pattern.permute.xlu0 127
      %440 = vperm.xlu0 %439, %v390
      %v441 = vpop.permute.xlu0 %440
      %444 = vset.pattern.permute.xlu0 127
      %445 = vperm.xlu0 %444, %v391
      %v446 = vpop.permute.xlu0 %445
      %449 = vset.pattern.permute.xlu0 127
      %450 = vperm.xlu0 %449, %v392
      %v451 = vpop.permute.xlu0 %450
      %454 = vset.pattern.permute.xlu0 127
      %455 = vperm.xlu0 %454, %v393
      %v456 = vpop.permute.xlu0 %455
      %459 = vset.pattern.permute.xlu0 127
      %460 = vperm.xlu0 %459, %v394
      %v461 = vpop.permute.xlu0 %460
      %464 = vset.pattern.permute.xlu0 127
      %465 = vperm.xlu0 %464, %v395
      %v466 = vpop.permute.xlu0 %465
      %469 = vset.pattern.permute.xlu0 127
      %470 = vperm.xlu0 %469, %v396
      %v471 = vpop.permute.xlu0 %470
      %474 = vset.pattern.permute.xlu0 127
      %475 = vperm.xlu0 %474, %v397
      %v476 = vpop.permute.xlu0 %475
      %v478 = vmul.f32 %v350, %v401
      %v479 = vmul.f32 %v351, %v406
      %v480 = vmul.f32 %v352, %v411
      %v481 = vmul.f32 %v353, %v416
      %v482 = vmul.f32 %v354, %v421
      %v483 = vmul.f32 %v355, %v426
      %v484 = vmul.f32 %v356, %v431
      %v485 = vmul.f32 %v357, %v436
      %v486 = vmul.f32 %v358, %v441
      %v487 = vmul.f32 %v359, %v446
      %v488 = vmul.f32 %v360, %v451
      %v489 = vmul.f32 %v361, %v456
      %v490 = vmul.f32 %v362, %v461
      %v491 = vmul.f32 %v363, %v466
      %v492 = vmul.f32 %v364, %v471
      %v493 = vmul.f32 %v365, %v476
      %v494 = vld [vmem:[#allocation9] sm:$0xff]
      %v495 = vld [vmem:[#allocation9 + $0x8] sm:$0xff]
      %v496 = vld [vmem:[#allocation9 + $0x10] sm:$0xff]
      %v497 = vld [vmem:[#allocation9 + $0x18] sm:$0xff]
      %v498 = vld [vmem:[#allocation9 + $0x20] sm:$0xff]
      %v499 = vld [vmem:[#allocation9 + $0x28] sm:$0xff]
      %v500 = vld [vmem:[#allocation9 + $0x30] sm:$0xff]
      %v501 = vld [vmem:[#allocation9 + $0x38] sm:$0xff]
      %v502 = vld [vmem:[#allocation9 + $0x40] sm:$0xff]
      %v503 = vld [vmem:[#allocation9 + $0x48] sm:$0xff]
      %v504 = vld [vmem:[#allocation9 + $0x50] sm:$0xff]
      %v505 = vld [vmem:[#allocation9 + $0x58] sm:$0xff]
      %v506 = vld [vmem:[#allocation9 + $0x60] sm:$0xff]
      %v507 = vld [vmem:[#allocation9 + $0x68] sm:$0xff]
      %v508 = vld [vmem:[#allocation9 + $0x70] sm:$0xff]
      %v509 = vld [vmem:[#allocation9 + $0x78] sm:$0xff]
      %v510 = vld [vmem:[#allocation8] sm:$0xf]
      %v511 = vld [vmem:[#allocation8 + $0x4] sm:$0xf]
      %v512 = vld [vmem:[#allocation8 + $0x8] sm:$0xf]
      %v513 = vld [vmem:[#allocation8 + $0xc] sm:$0xf]
      %v514 = vld [vmem:[#allocation8 + $0x10] sm:$0xf]
      %v515 = vld [vmem:[#allocation8 + $0x14] sm:$0xf]
      %v516 = vld [vmem:[#allocation8 + $0x18] sm:$0xf]
      %v517 = vld [vmem:[#allocation8 + $0x1c] sm:$0xf]
      %v518 = vld [vmem:[#allocation8 + $0x20] sm:$0xf]
      %v519 = vld [vmem:[#allocation8 + $0x24] sm:$0xf]
      %v520 = vld [vmem:[#allocation8 + $0x28] sm:$0xf]
      %v521 = vld [vmem:[#allocation8 + $0x2c] sm:$0xf]
      %v522 = vld [vmem:[#allocation8 + $0x30] sm:$0xf]
      %v523 = vld [vmem:[#allocation8 + $0x34] sm:$0xf]
      %v524 = vld [vmem:[#allocation8 + $0x38] sm:$0xf]
      %v525 = vld [vmem:[#allocation8 + $0x3c] sm:$0xf]
      %v526 = vunpack.c.l.bf16 %v510
      %v527 = vunpack.c.l.bf16 %v511
      %v528 = vunpack.c.l.bf16 %v512
      %v529 = vunpack.c.l.bf16 %v513
      %v530 = vunpack.c.l.bf16 %v514
      %v531 = vunpack.c.l.bf16 %v515
      %v532 = vunpack.c.l.bf16 %v516
      %v533 = vunpack.c.l.bf16 %v517
      %v534 = vunpack.c.l.bf16 %v518
      %v535 = vunpack.c.l.bf16 %v519
      %v536 = vunpack.c.l.bf16 %v520
      %v537 = vunpack.c.l.bf16 %v521
      %v538 = vunpack.c.l.bf16 %v522
      %v539 = vunpack.c.l.bf16 %v523
      %v540 = vunpack.c.l.bf16 %v524
      %v541 = vunpack.c.l.bf16 %v525
      %v542 = vld [vmem:[#allocation11] sm:$0xff]
      %v543 = vld [vmem:[#allocation11 + $0x8] sm:$0xff]
      %v544 = vld [vmem:[#allocation11 + $0x10] sm:$0xff]
      %v545 = vld [vmem:[#allocation11 + $0x18] sm:$0xff]
      %v546 = vld [vmem:[#allocation11 + $0x20] sm:$0xff]
      %v547 = vld [vmem:[#allocation11 + $0x28] sm:$0xff]
      %v548 = vld [vmem:[#allocation11 + $0x30] sm:$0xff]
      %v549 = vld [vmem:[#allocation11 + $0x38] sm:$0xff]
      %v550 = vld [vmem:[#allocation11 + $0x40] sm:$0xff]
      %v551 = vld [vmem:[#allocation11 + $0x48] sm:$0xff]
      %v552 = vld [vmem:[#allocation11 + $0x50] sm:$0xff]
      %v553 = vld [vmem:[#allocation11 + $0x58] sm:$0xff]
      %v554 = vld [vmem:[#allocation11 + $0x60] sm:$0xff]
      %v555 = vld [vmem:[#allocation11 + $0x68] sm:$0xff]
      %v556 = vld [vmem:[#allocation11 + $0x70] sm:$0xff]
      %v557 = vld [vmem:[#allocation11 + $0x78] sm:$0xff]
      %558 = vmatpush.msra.mxu0 %v557
      %559 = vmatpush.msra.mxu0 %v556
      %560 = vmatpush.msra.mxu0 %v555
      %561 = vmatpush.msra.mxu0 %v554
      %562 = vmatpush.msra.mxu0 %v553
      %563 = vmatpush.msra.mxu0 %v552
      %564 = vmatpush.msra.mxu0 %v551
      %565 = vmatpush.msra.mxu0 %v550
      %566 = vmatpush.msra.mxu0 %v549
      %567 = vmatpush.msra.mxu0 %v548
      %568 = vmatpush.msra.mxu0 %v547
      %569 = vmatpush.msra.mxu0 %v546
      %570 = vmatpush.msra.mxu0 %v545
      %571 = vmatpush.msra.mxu0 %v544
      %572 = vmatpush.msra.mxu0 %v543
      %573 = vmatpush.msra.mxu0 %v542
      %574 = vmatmul.f32.gmra.mxu0 %v526
      %v575 = vpop.f32.mrf.mxu0
      %v576 = vadd.f32 0.0, %v575
      %577 = vmatmul.f32.gmra.mxu0 %v527
      %v578 = vpop.f32.mrf.mxu0
      %v579 = vadd.f32 0.0, %v578
      %580 = vmatmul.f32.gmra.mxu0 %v528
      %v581 = vpop.f32.mrf.mxu0
      %v582 = vadd.f32 0.0, %v581
      %583 = vmatmul.f32.gmra.mxu0 %v529
      %v584 = vpop.f32.mrf.mxu0
      %v585 = vadd.f32 0.0, %v584
      %586 = vmatmul.f32.gmra.mxu0 %v530
      %v587 = vpop.f32.mrf.mxu0
      %v588 = vadd.f32 0.0, %v587
      %589 = vmatmul.f32.gmra.mxu0 %v531
      %v590 = vpop.f32.mrf.mxu0
      %v591 = vadd.f32 0.0, %v590
      %592 = vmatmul.f32.gmra.mxu0 %v532
      %v593 = vpop.f32.mrf.mxu0
      %v594 = vadd.f32 0.0, %v593
      %595 = vmatmul.f32.gmra.mxu0 %v533
      %v596 = vpop.f32.mrf.mxu0
      %v597 = vadd.f32 0.0, %v596
      %598 = vmatmul.f32.gmra.mxu0 %v534
      %v599 = vpop.f32.mrf.mxu0
      %v600 = vadd.f32 0.0, %v599
      %601 = vmatmul.f32.gmra.mxu0 %v535
      %v602 = vpop.f32.mrf.mxu0
      %v603 = vadd.f32 0.0, %v602
      %604 = vmatmul.f32.gmra.mxu0 %v536
      %v605 = vpop.f32.mrf.mxu0
      %v606 = vadd.f32 0.0, %v605
      %607 = vmatmul.f32.gmra.mxu0 %v537
      %v608 = vpop.f32.mrf.mxu0
      %v609 = vadd.f32 0.0, %v608
      %610 = vmatmul.f32.gmra.mxu0 %v538
      %v611 = vpop.f32.mrf.mxu0
      %v612 = vadd.f32 0.0, %v611
      %613 = vmatmul.f32.gmra.mxu0 %v539
      %v614 = vpop.f32.mrf.mxu0
      %v615 = vadd.f32 0.0, %v614
      %616 = vmatmul.f32.gmra.mxu0 %v540
      %v617 = vpop.f32.mrf.mxu0
      %v618 = vadd.f32 0.0, %v617
      %619 = vmatmul.f32.gmra.mxu0 %v541
      %v620 = vpop.f32.mrf.mxu0
      %v621 = vadd.f32 0.0, %v620
      %622 = vdwg.mxu0
      %623 = vmatpush.msra.mxu0 %v509
      %624 = vmatpush.msra.mxu0 %v508
      %625 = vmatpush.msra.mxu0 %v507
      %626 = vmatpush.msra.mxu0 %v506
      %627 = vmatpush.msra.mxu0 %v505
      %628 = vmatpush.msra.mxu0 %v504
      %629 = vmatpush.msra.mxu0 %v503
      %630 = vmatpush.msra.mxu0 %v502
      %631 = vmatpush.msra.mxu0 %v501
      %632 = vmatpush.msra.mxu0 %v500
      %633 = vmatpush.msra.mxu0 %v499
      %634 = vmatpush.msra.mxu0 %v498
      %635 = vmatpush.msra.mxu0 %v497
      %636 = vmatpush.msra.mxu0 %v496
      %637 = vmatpush.msra.mxu0 %v495
      %638 = vmatpush.msra.mxu0 %v494
      %639 = vmatmul.f32.gmra.mxu0 %v478
      %v640 = vpop.f32.mrf.mxu0
      %v641 = vadd.f32 %v576, %v640
      %642 = vmatmul.f32.gmra.mxu0 %v479
      %v643 = vpop.f32.mrf.mxu0
      %v644 = vadd.f32 %v579, %v643
      %645 = vmatmul.f32.gmra.mxu0 %v480
      %v646 = vpop.f32.mrf.mxu0
      %v647 = vadd.f32 %v582, %v646
      %648 = vmatmul.f32.gmra.mxu0 %v481
      %v649 = vpop.f32.mrf.mxu0
      %v650 = vadd.f32 %v585, %v649
      %651 = vmatmul.f32.gmra.mxu0 %v482
      %v652 = vpop.f32.mrf.mxu0
      %v653 = vadd.f32 %v588, %v652
      %654 = vmatmul.f32.gmra.mxu0 %v483
      %v655 = vpop.f32.mrf.mxu0
      %v656 = vadd.f32 %v591, %v655
      %657 = vmatmul.f32.gmra.mxu0 %v484
      %v658 = vpop.f32.mrf.mxu0
      %v659 = vadd.f32 %v594, %v658
      %660 = vmatmul.f32.gmra.mxu0 %v485
      %v661 = vpop.f32.mrf.mxu0
      %v662 = vadd.f32 %v597, %v661
      %663 = vmatmul.f32.gmra.mxu0 %v486
      %v664 = vpop.f32.mrf.mxu0
      %v665 = vadd.f32 %v600, %v664
      %666 = vmatmul.f32.gmra.mxu0 %v487
      %v667 = vpop.f32.mrf.mxu0
      %v668 = vadd.f32 %v603, %v667
      %669 = vmatmul.f32.gmra.mxu0 %v488
      %v670 = vpop.f32.mrf.mxu0
      %v671 = vadd.f32 %v606, %v670
      %672 = vmatmul.f32.gmra.mxu0 %v489
      %v673 = vpop.f32.mrf.mxu0
      %v674 = vadd.f32 %v609, %v673
      %675 = vmatmul.f32.gmra.mxu0 %v490
      %v676 = vpop.f32.mrf.mxu0
      %v677 = vadd.f32 %v612, %v676
      %678 = vmatmul.f32.gmra.mxu0 %v491
      %v679 = vpop.f32.mrf.mxu0
      %v680 = vadd.f32 %v615, %v679
      %681 = vmatmul.f32.gmra.mxu0 %v492
      %v682 = vpop.f32.mrf.mxu0
      %v683 = vadd.f32 %v618, %v682
      %684 = vmatmul.f32.gmra.mxu0 %v493
      %v685 = vpop.f32.mrf.mxu0
      %v686 = vadd.f32 %v621, %v685
      %687 = vdwg.mxu0
      %v688 = vld [vmem:[%s5] sm:$0x1]
      %v690 = vperm.slane %v688, 0
      %v692 = vadd.f32 %v641, %v690
      %v693 = vadd.f32 %v644, %v690
      %v694 = vadd.f32 %v647, %v690
      %v695 = vadd.f32 %v650, %v690
      %v696 = vadd.f32 %v653, %v690
      %v697 = vadd.f32 %v656, %v690
      %v698 = vadd.f32 %v659, %v690
      %v699 = vadd.f32 %v662, %v690
      %v700 = vadd.f32 %v665, %v690
      %v701 = vadd.f32 %v668, %v690
      %v702 = vadd.f32 %v671, %v690
      %v703 = vadd.f32 %v674, %v690
      %v704 = vadd.f32 %v677, %v690
      %v705 = vadd.f32 %v680, %v690
      %v706 = vadd.f32 %v683, %v690
      %v707 = vadd.f32 %v686, %v690
      %v708 = vmax.f32 %v692, 0.0
      %v709 = vmax.f32 %v693, 0.0
      %v710 = vmax.f32 %v694, 0.0
      %v711 = vmax.f32 %v695, 0.0
      %v712 = vmax.f32 %v696, 0.0
      %v713 = vmax.f32 %v697, 0.0
      %v714 = vmax.f32 %v698, 0.0
      %v715 = vmax.f32 %v699, 0.0
      %v716 = vmax.f32 %v700, 0.0
      %v717 = vmax.f32 %v701, 0.0
      %v718 = vmax.f32 %v702, 0.0
      %v719 = vmax.f32 %v703, 0.0
      %v720 = vmax.f32 %v704, 0.0
      %v721 = vmax.f32 %v705, 0.0
      %v722 = vmax.f32 %v706, 0.0
      %v723 = vmax.f32 %v707, 0.0
      %v724 = vlaneseq
      %v725 = vand.u32 %v724, 127
      %vm726 = vcmp.eq.s32.totalorder %v725, 127
      %v727 = vsel %vm726, 1.0, %v708
      %v728 = vsel %vm726, 1.0, %v709
      %v729 = vsel %vm726, 1.0, %v710
      %v730 = vsel %vm726, 1.0, %v711
      %v731 = vsel %vm726, 1.0, %v712
      %v732 = vsel %vm726, 1.0, %v713
      %v733 = vsel %vm726, 1.0, %v714
      %v734 = vsel %vm726, 1.0, %v715
      %v735 = vsel %vm726, 1.0, %v716
      %v736 = vsel %vm726, 1.0, %v717
      %v737 = vsel %vm726, 1.0, %v718
      %v738 = vsel %vm726, 1.0, %v719
      %v739 = vsel %vm726, 1.0, %v720
      %v740 = vsel %vm726, 1.0, %v721
      %v741 = vsel %vm726, 1.0, %v722
      %v742 = vsel %vm726, 1.0, %v723
      %v743 = vpack.c.bf16 %v727, %v727
      %v744 = vpack.c.bf16 %v728, %v728
      %v745 = vpack.c.bf16 %v729, %v729
      %v746 = vpack.c.bf16 %v730, %v730
      %v747 = vpack.c.bf16 %v731, %v731
      %v748 = vpack.c.bf16 %v732, %v732
      %v749 = vpack.c.bf16 %v733, %v733
      %v750 = vpack.c.bf16 %v734, %v734
      %v751 = vpack.c.bf16 %v735, %v735
      %v752 = vpack.c.bf16 %v736, %v736
      %v753 = vpack.c.bf16 %v737, %v737
      %v754 = vpack.c.bf16 %v738, %v738
      %v755 = vpack.c.bf16 %v739, %v739
      %v756 = vpack.c.bf16 %v740, %v740
      %v757 = vpack.c.bf16 %v741, %v741
      %v758 = vpack.c.bf16 %v742, %v742
      %759 = vst [vmem:[#allocation12] sm:$0xf] %v743
      %760 = vst [vmem:[#allocation12 + $0x4] sm:$0xf] %v744
      %761 = vst [vmem:[#allocation12 + $0x8] sm:$0xf] %v745
      %762 = vst [vmem:[#allocation12 + $0xc] sm:$0xf] %v746
      %763 = vst [vmem:[#allocation12 + $0x10] sm:$0xf] %v747
      %764 = vst [vmem:[#allocation12 + $0x14] sm:$0xf] %v748
      %765 = vst [vmem:[#allocation12 + $0x18] sm:$0xf] %v749
      %766 = vst [vmem:[#allocation12 + $0x1c] sm:$0xf] %v750
      %767 = vst [vmem:[#allocation12 + $0x20] sm:$0xf] %v751
      %768 = vst [vmem:[#allocation12 + $0x24] sm:$0xf] %v752
      %769 = vst [vmem:[#allocation12 + $0x28] sm:$0xf] %v753
      %770 = vst [vmem:[#allocation12 + $0x2c] sm:$0xf] %v754
      %771 = vst [vmem:[#allocation12 + $0x30] sm:$0xf] %v755
      %772 = vst [vmem:[#allocation12 + $0x34] sm:$0xf] %v756
      %773 = vst [vmem:[#allocation12 + $0x38] sm:$0xf] %v757
      %774 = vst [vmem:[#allocation12 + $0x3c] sm:$0xf] %v758
    $region53: #{tpu_custom_call.1} parent=1 // pred_fallthru
      _
    // Predicated region
    $region54: #{tpu_custom_call.1} parent=1 // pred_check
      _
    $region55: #{tpu_custom_call.1} parent=1 // pred_check_branch
      %776 = sbr.rel (0) target = $region57
    $region56: #{tpu_custom_call.1} parent=1 // pred_region
      %778 = vsyncadd [#allocation5], 0
      %s779 = sshll.u32 [#allocation12], 4
      %s780 = int_to_ptr.vmem [resolvable:$true] %s779
      %s781 = sshll.u32 %s6, 4
      %s782 = int_to_ptr.hbm [resolvable:$true] %s781
      %787 = dma.vmem_to_hbm [thread:$0]  %s780, 1024, %s782, [#allocation5], 64, 64, 4
    $region57: #{tpu_custom_call.1} parent=1 // pred_fallthru
      _
    // Predicated region
    $region58: #{tpu_custom_call.1} parent=1 // pred_check
      _
    $region59: #{tpu_custom_call.1} parent=1 // pred_check_branch
      %789 = sbr.rel (0) target = $region61
    $region60: #{tpu_custom_call.1} parent=1 // pred_region
      %791 = dma.done [#allocation5], 1024
    $region61: #{tpu_custom_call.1} parent=1 // pred_fallthru
      _
    %792 = vsyncpa [#allocation4], 1
    %793 = vsyncpa [#allocation7], 1
    %794 = vsyncpa [#allocation10], 1
    %795 = vsyncpa [#allocation5], 1

</llo_original>
